<compile_context>
chip_gen: v6e
topology: v6e:2x2x1
jax: 0.10.0
libtpu: 0.0.40
codegen_flags: <defaults>
</compile_context>

<pallas_src>
import jax
import jax.numpy as jnp
from jax import lax
from jax.experimental import pallas as pl
from jax.experimental.pallas import tpu as pltpu


def _score_kernel(h1_ref, h2_ref, h3_ref, h4_ref, p_ref, b_ref, o_ref):
    """o_ref[k, :] = h_k_tile @ (W @ c_g(k)^T) + b, lane-dense (4, TM) layout.

    h*_ref: (TM, D) tiles of h1..h4   (pipelined HBM streams)
    p_ref : (4, D)  rows p[k] = c_g(k) @ W^T   (resident, tiny)
    b_ref : (1, 1)  bias scalar (SMEM)
    o_ref : (4, TM) scores; row k = sc_{k+1} for this tile
    """
    b = b_ref[0, 0]
    # Contract last dim of both operands (rhs-transposed matmul): (1,D)x(TM,D)->(1,TM)
    dn = (((1,), (1,)), ((), ()))
    for k, h_ref in enumerate((h1_ref, h2_ref, h3_ref, h4_ref)):
        s = lax.dot_general(p_ref[k:k + 1, :], h_ref[...], dn,
                            preferred_element_type=jnp.float32)     # (1, TM)
        o_ref[k:k + 1, :] = (s + b).astype(o_ref.dtype)


def discriminator_forward(h1, h2, h3, h4, c1, c2, weight, bias, *, tm=None):
    """Pallas implementation of Discriminator.forward.

    h1..h4: (N, D) float32
    c1, c2: (1, D) float32 (PyTorch expands these; we exploit the broadcast)
    weight: (D, D) float32  (== nn.Bilinear weight[0])
    bias:   ()     float32  (== nn.Bilinear bias[0])
    returns (4*N,) float32
    """
    n, d = h1.shape
    f32 = jnp.float32
    h1, h2, h3, h4 = (x.astype(f32) for x in (h1, h2, h3, h4))

    # Hoisted once: p2[g] = c_g @ W^T  (== (W @ c_g^T)^T).  Rows replicated to
    # the per-h-group order (h1->c1, h2->c2, h3->c1, h4->c2).
    c_pair = jnp.concatenate([c1, c2], axis=0).astype(f32)              # (2, D)
    p2 = jnp.dot(c_pair, weight.astype(f32).T,
                 precision=lax.Precision.HIGHEST)                       # (2, D)
    p4 = jnp.concatenate([p2, p2], axis=0)                              # (4, D): c1,c2,c1,c2
    b2d = jnp.reshape(bias.astype(f32), (1, 1))

    if tm is None:
        # 4 double-buffered f32 H streams per grid step; keep them <= ~16 MiB.
        budget = 16 * 1024 * 1024
        tm = budget // (4 * 2 * d * 4)
        tm = max(128, min(1024, (tm // 128) * 128))
    if n <= tm:
        tm = n          # single tile: full-extent blocks are always layout-legal
    num_tiles = pl.cdiv(n, tm)

    cost = pl.CostEstimate(
        flops=2 * 4 * n * d,               # one length-D dot per output element
        transcendentals=0,
        bytes_accessed=(4 * n * d + 4 * d + 4 * n + 1) * 4,
    )

    h_spec = pl.BlockSpec((tm, d), lambda i: (i, 0))
    scores = pl.pallas_call(
        _score_kernel,
        out_shape=jax.ShapeDtypeStruct((4, n), f32),
        grid_spec=pltpu.PrefetchScalarGridSpec(
            num_scalar_prefetch=0,
            grid=(num_tiles,),
            in_specs=[h_spec, h_spec, h_spec, h_spec,          # h1..h4 (pipelined)
                      pl.BlockSpec((4, d), lambda i: (0, 0)),  # p4 (resident, tiny)
                      pl.BlockSpec(memory_space=pltpu.SMEM)],  # bias scalar
            out_specs=pl.BlockSpec((4, tm), lambda i: (0, i)), # lane-dense rows
        ),
        compiler_params=pltpu.CompilerParams(
            dimension_semantics=("parallel",),
            vmem_limit_bytes=32 * 1024 * 1024),
        cost_estimate=cost,
    )(h1, h2, h3, h4, p4, b2d)

    # Row-major reshape of (4, N) == torch.cat((sc_1, sc_2, sc_3, sc_4)).
    return scores.reshape(4 * n)


if __name__ == "__main__":
    # Small shapes consistent with the module: batch N=2, dim=32.
    N, D = 2, 32
    key = jax.random.PRNGKey(0)
    ks = jax.random.split(key, 8)
    h1, h2, h3, h4 = (jax.random.normal(k, (N, D), jnp.float32) for k in ks[:4])
    c1 = jax.random.normal(ks[4], (1, D), jnp.float32)
    c2 = jax.random.normal(ks[5], (1, D), jnp.float32)

    # Deterministic parameter init mirroring nn.Bilinear(dim, dim, 1).
    bound = 1.0 / jnp.sqrt(jnp.float32(D))
    weight = jax.random.uniform(ks[6], (D, D), jnp.float32, -bound, bound)
    bias = jax.random.uniform(ks[7], (), jnp.float32, -bound, bound)

    def ref_logits(a1, a2, a3, a4, cc1, cc2):
        def score(h, c):
            cx = jnp.broadcast_to(c, h.shape)
            return jnp.einsum("ni,ij,nj->n", h, weight, cx,
                              precision=lax.Precision.HIGHEST) + bias
        return jnp.concatenate([score(a1, cc1), score(a2, cc2),
                                score(a3, cc1), score(a4, cc2)])

    logits = jax.block_until_ready(
        discriminator_forward(h1, h2, h3, h4, c1, c2, weight, bias))
    ref = ref_logits(h1, h2, h3, h4, c1, c2)
    assert logits.shape == (4 * N,)
    # Kernel matmul uses default MXU precision; at D=32 drift is << atol.
    assert jnp.allclose(logits, ref, atol=1e-4, rtol=1e-5)

    # Also exercise the multi-tile path with a partial last tile (N % tm != 0).
    N2 = 200
    ks2 = jax.random.split(jax.random.PRNGKey(1), 6)
    g1, g2, g3, g4 = (jax.random.normal(k, (N2, D), jnp.float32) for k in ks2[:4])
    d1 = jax.random.normal(ks2[4], (1, D), jnp.float32)
    d2 = jax.random.normal(ks2[5], (1, D), jnp.float32)
    logits2 = jax.block_until_ready(
        discriminator_forward(g1, g2, g3, g4, d1, d2, weight, bias, tm=128))
    ref2 = ref_logits(g1, g2, g3, g4, d1, d2)
    assert logits2.shape == (4 * N2,)
    assert jnp.allclose(logits2, ref2, atol=1e-4, rtol=1e-5)

    print("KERNEL_OK")
</pallas_src>

<mosaic_0001>
module attributes {stable_mosaic.version = 11 : i64} {
  func.func @_score_kernel(%arg0: i32, %arg1: memref<2x32xf32, #tpu.memory_space<vmem>>, %arg2: memref<2x32xf32, #tpu.memory_space<vmem>>, %arg3: memref<2x32xf32, #tpu.memory_space<vmem>>, %arg4: memref<2x32xf32, #tpu.memory_space<vmem>>, %arg5: memref<4x32xf32, #tpu.memory_space<vmem>>, %arg6: memref<1x1xf32, #tpu.memory_space<smem>>, %arg7: memref<4x2xf32, #tpu.memory_space<vmem>>) attributes {dimension_semantics = [#tpu.dimension_semantics<parallel>], iteration_bounds = array<i64: 1>, scalar_prefetch = 0 : i64, scratch_operands = 0 : i64, tpu.core_type = #tpu.core_type<tc>, window_params = [{transform_indices = @transform_0, window_bounds = array<i64: 2, 32>}, {transform_indices = @transform_1, window_bounds = array<i64: 2, 32>}, {transform_indices = @transform_2, window_bounds = array<i64: 2, 32>}, {transform_indices = @transform_3, window_bounds = array<i64: 2, 32>}, {pipeline_mode = #tpu.pipeline_mode<synchronous>, transform_indices = @transform_4, window_bounds = array<i64: 4, 32>}, {transform_indices = @transform_5, window_bounds = array<i64: 1, 1>}, {transform_indices = @transform_6, window_bounds = array<i64: 4, 2>}]} {
    %c0 = arith.constant 0 : index
    %c0_0 = arith.constant 0 : index
    %0 = memref.load %arg6[%c0, %c0_0] : memref<1x1xf32, #tpu.memory_space<smem>>
    %c0_1 = arith.constant 0 : index
    %c0_2 = arith.constant 0 : index
    %1 = vector.load %arg5[%c0_1, %c0_2] : memref<4x32xf32, #tpu.memory_space<vmem>>, vector<1x32xf32>
    %c0_3 = arith.constant 0 : index
    %c0_4 = arith.constant 0 : index
    %2 = vector.load %arg1[%c0_3, %c0_4] : memref<2x32xf32, #tpu.memory_space<vmem>>, vector<2x32xf32>
    %cst = arith.constant dense<0.000000e+00> : vector<1x2xf32>
    %3 = tpu.matmul %1, %2, %cst {dimension_numbers = #tpu.dot_dimension_numbers<[1], [1], [0], [0], [0, 0, 1, 0], [], []>} : vector<1x32xf32>, vector<2x32xf32>, vector<1x2xf32> -> vector<1x2xf32>
    %4 = vector.broadcast %0 : f32 to vector<1x2xf32>
    %5 = arith.addf %3, %4 : vector<1x2xf32>
    %c0_5 = arith.constant 0 : index
    %c0_6 = arith.constant 0 : index
    %6 = vector.load %arg7[%c0_5, %c0_6] : memref<4x2xf32, #tpu.memory_space<vmem>>, vector<1x2xf32>
    tpu.vector_store %arg7[%c0_5, %c0_6], %5 {strides = array<i32>} : memref<4x2xf32, #tpu.memory_space<vmem>>, vector<1x2xf32>,
    %c1 = arith.constant 1 : index
    %c0_7 = arith.constant 0 : index
    %7 = vector.load %arg5[%c1, %c0_7] : memref<4x32xf32, #tpu.memory_space<vmem>>, vector<1x32xf32>
    %c0_8 = arith.constant 0 : index
    %c0_9 = arith.constant 0 : index
    %8 = vector.load %arg2[%c0_8, %c0_9] : memref<2x32xf32, #tpu.memory_space<vmem>>, vector<2x32xf32>
    %cst_10 = arith.constant dense<0.000000e+00> : vector<1x2xf32>
    %9 = tpu.matmul %7, %8, %cst_10 {dimension_numbers = #tpu.dot_dimension_numbers<[1], [1], [0], [0], [0, 0, 1, 0], [], []>} : vector<1x32xf32>, vector<2x32xf32>, vector<1x2xf32> -> vector<1x2xf32>
    %10 = vector.broadcast %0 : f32 to vector<1x2xf32>
    %11 = arith.addf %9, %10 : vector<1x2xf32>
    %c1_11 = arith.constant 1 : index
    %c0_12 = arith.constant 0 : index
    %12 = vector.load %arg7[%c1_11, %c0_12] : memref<4x2xf32, #tpu.memory_space<vmem>>, vector<1x2xf32>
    tpu.vector_store %arg7[%c1_11, %c0_12], %11 {strides = array<i32>} : memref<4x2xf32, #tpu.memory_space<vmem>>, vector<1x2xf32>,
    %c2 = arith.constant 2 : index
    %c0_13 = arith.constant 0 : index
    %13 = vector.load %arg5[%c2, %c0_13] : memref<4x32xf32, #tpu.memory_space<vmem>>, vector<1x32xf32>
    %c0_14 = arith.constant 0 : index
    %c0_15 = arith.constant 0 : index
    %14 = vector.load %arg3[%c0_14, %c0_15] : memref<2x32xf32, #tpu.memory_space<vmem>>, vector<2x32xf32>
    %cst_16 = arith.constant dense<0.000000e+00> : vector<1x2xf32>
    %15 = tpu.matmul %13, %14, %cst_16 {dimension_numbers = #tpu.dot_dimension_numbers<[1], [1], [0], [0], [0, 0, 1, 0], [], []>} : vector<1x32xf32>, vector<2x32xf32>, vector<1x2xf32> -> vector<1x2xf32>
    %16 = vector.broadcast %0 : f32 to vector<1x2xf32>
    %17 = arith.addf %15, %16 : vector<1x2xf32>
    %c2_17 = arith.constant 2 : index
    %c0_18 = arith.constant 0 : index
    %18 = vector.load %arg7[%c2_17, %c0_18] : memref<4x2xf32, #tpu.memory_space<vmem>>, vector<1x2xf32>
    tpu.vector_store %arg7[%c2_17, %c0_18], %17 {strides = array<i32>} : memref<4x2xf32, #tpu.memory_space<vmem>>, vector<1x2xf32>,
    %c3 = arith.constant 3 : index
    %c0_19 = arith.constant 0 : index
    %19 = vector.load %arg5[%c3, %c0_19] : memref<4x32xf32, #tpu.memory_space<vmem>>, vector<1x32xf32>
    %c0_20 = arith.constant 0 : index
    %c0_21 = arith.constant 0 : index
    %20 = vector.load %arg4[%c0_20, %c0_21] : memref<2x32xf32, #tpu.memory_space<vmem>>, vector<2x32xf32>
    %cst_22 = arith.constant dense<0.000000e+00> : vector<1x2xf32>
    %21 = tpu.matmul %19, %20, %cst_22 {dimension_numbers = #tpu.dot_dimension_numbers<[1], [1], [0], [0], [0, 0, 1, 0], [], []>} : vector<1x32xf32>, vector<2x32xf32>, vector<1x2xf32> -> vector<1x2xf32>
    %22 = vector.broadcast %0 : f32 to vector<1x2xf32>
    %23 = arith.addf %21, %22 : vector<1x2xf32>
    %c3_23 = arith.constant 3 : index
    %c0_24 = arith.constant 0 : index
    %24 = vector.load %arg7[%c3_23, %c0_24] : memref<4x2xf32, #tpu.memory_space<vmem>>, vector<1x2xf32>
    tpu.vector_store %arg7[%c3_23, %c0_24], %23 {strides = array<i32>} : memref<4x2xf32, #tpu.memory_space<vmem>>, vector<1x2xf32>,
    return
  }
  func.func @transform_0(%arg0: i32) -> (i32, i32) {
    %c0_i32 = arith.constant 0 : i32
    %c0_i32_0 = arith.constant 0 : i32
    return %arg0, %c0_i32 : i32, i32
  }
  func.func @transform_1(%arg0: i32) -> (i32, i32) {
    %c0_i32 = arith.constant 0 : i32
    %c0_i32_0 = arith.constant 0 : i32
    return %arg0, %c0_i32 : i32, i32
  }
  func.func @transform_2(%arg0: i32) -> (i32, i32) {
    %c0_i32 = arith.constant 0 : i32
    %c0_i32_0 = arith.constant 0 : i32
    return %arg0, %c0_i32 : i32, i32
  }
  func.func @transform_3(%arg0: i32) -> (i32, i32) {
    %c0_i32 = arith.constant 0 : i32
    %c0_i32_0 = arith.constant 0 : i32
    return %arg0, %c0_i32 : i32, i32
  }
  func.func @transform_4(%arg0: i32) -> (i32, i32) {
    %c0_i32 = arith.constant 0 : i32
    %c0_i32_0 = arith.constant 0 : i32
    %c0_i32_1 = arith.constant 0 : i32
    return %c0_i32, %c0_i32_0 : i32, i32
  }
  func.func @transform_5(%arg0: i32) -> (i32, i32) {
    %c0_i32 = arith.constant 0 : i32
    %c0_i32_0 = arith.constant 0 : i32
    %c0_i32_1 = arith.constant 0 : i32
    return %c0_i32, %c0_i32_0 : i32, i32
  }
  func.func @transform_6(%arg0: i32) -> (i32, i32) {
    %c0_i32 = arith.constant 0 : i32
    %c0_i32_0 = arith.constant 0 : i32
    return %c0_i32, %arg0 : i32, i32
  }
}

</mosaic_0001>

<llo_original>
// kernel: tpu_custom_call.1
$region0: #{tpu_custom_call.1}
  #allocation0 [shape = 'u32[]', space=smem, size = 0x4, offset = 0x4, fixed_abs, tag = 'smem constant byte address 0x4 - core index']
  #allocation1 [shape = 'u32[144,128]{1,0:T(1,128)}', space=vmem, size = 0x12000, scoped, tag = 'internal scratch']
  #allocation2 [shape = 'f32[1,1]{1,0:T(1,128)S(6)}', space=smem, size = 0x200, scoped, tag = 'scoped memory for tpu_custom_call.1']
  %s0 = inlined_call_operand.vmem [shape: f32[2,32], index: 0, kind: input, shape index: {}]
  %s1 = inlined_call_operand.hbm [shape: f32[2,32], index: 1, kind: input, shape index: {}]
  %s2 = inlined_call_operand.hbm [shape: f32[2,32], index: 2, kind: input, shape index: {}]
  %s3 = inlined_call_operand.hbm [shape: f32[2,32], index: 3, kind: input, shape index: {}]
  %s4 = inlined_call_operand.vmem [shape: f32[4,32], index: 4, kind: input, shape index: {}]
  %s5 = inlined_call_operand.<no memory space> [shape: f32[1,1], index: 5, kind: input, shape index: {}]
  %s6 = inlined_call_operand.vmem [shape: f32[4,2], index: 6, kind: output, shape index: {}]
  %s7 = sld [smem:[#allocation0]]
  $region46: #{tpu_custom_call.1} parent=0
    _
  %s9 = ssub.s32 1, %s7
  %s10 = scalar_select 0, %s9, %s7
  %11 = sst [smem:[#allocation2]] %s5
  $region1: #{tpu_custom_call.1} parent=0
    #allocation3 [shape = 'u8[1024]{0}', space=vmem, size = 0x400, scoped, tag = 'input window, operand 1, single buffered']
    #allocation4 [shape = 's32[1]{0}', space=sflag, size = 0x4, scoped, tag = 'scoped memory for tpu_custom_call.1']
    #allocation5 [shape = 'u8[1024]{0}', space=vmem, size = 0x400, scoped, tag = 'input window, operand 2, single buffered']
    #allocation6 [shape = 's32[1]{0}', space=sflag, size = 0x4, scoped, tag = 'scoped memory for tpu_custom_call.1']
    #allocation7 [shape = 'u8[1024]{0}', space=vmem, size = 0x400, scoped, tag = 'input window, operand 3, single buffered']
    %12 = vsyncpa [#allocation4], 0
    %13 = vsyncpa [#allocation6], 0
    // Predicated region
    $region2: #{tpu_custom_call.1} parent=1 // pred_check
      _
    $region3: #{tpu_custom_call.1} parent=1 // pred_check_branch
      %15 = sbr.rel (0) target = $region5
    $region4: #{tpu_custom_call.1} parent=1 // pred_region
      _
    $region5: #{tpu_custom_call.1} parent=1 // pred_fallthru
      _
    // Predicated region
    $region6: #{tpu_custom_call.1} parent=1 // pred_check
      _
    $region7: #{tpu_custom_call.1} parent=1 // pred_check_branch
      %17 = sbr.rel (0) target = $region9
    $region8: #{tpu_custom_call.1} parent=1 // pred_region
      %s19 = ssub.s32 32, 32
      %20 = vsyncadd [#allocation4], %s19
      %s22 = sshll.u32 [#allocation3], 4
      %s23 = int_to_ptr.vmem [resolvable:$true] %s22
      %25 = dma.hbm_to_vmem [thread:$0]  %s1, 32, %s23, [#allocation4]
    $region9: #{tpu_custom_call.1} parent=1 // pred_fallthru
      _
    // Predicated region
    $region10: #{tpu_custom_call.1} parent=1 // pred_check
      _
    $region11: #{tpu_custom_call.1} parent=1 // pred_check_branch
      %27 = sbr.rel (0) target = $region13
    $region12: #{tpu_custom_call.1} parent=1 // pred_region
      %s29 = ssub.s32 32, 32
      %30 = vsyncadd [#allocation6], %s29
      %s32 = sshll.u32 [#allocation5], 4
      %s33 = int_to_ptr.vmem [resolvable:$true] %s32
      %35 = dma.hbm_to_vmem [thread:$0]  %s2, 32, %s33, [#allocation6]
    $region13: #{tpu_custom_call.1} parent=1 // pred_fallthru
      _
    // Predicated region
    $region14: #{tpu_custom_call.1} parent=1 // pred_check
      _
    $region15: #{tpu_custom_call.1} parent=1 // pred_check_branch
      %37 = sbr.rel (0) target = $region17
    $region16: #{tpu_custom_call.1} parent=1 // pred_region
      %s39 = ssub.s32 32, 32
      %40 = vsyncadd [#allocation6], %s39
      %s42 = sshll.u32 [#allocation7], 4
      %s43 = int_to_ptr.vmem [resolvable:$true] %s42
      %45 = dma.hbm_to_vmem [thread:$0]  %s3, 32, %s43, [#allocation6]
    $region17: #{tpu_custom_call.1} parent=1 // pred_fallthru
      _
    // Predicated region
    $region18: #{tpu_custom_call.1} parent=1 // pred_check
      _
    $region19: #{tpu_custom_call.1} parent=1 // pred_check_branch
      %47 = sbr.rel (0) target = $region21
    $region20: #{tpu_custom_call.1} parent=1 // pred_region
      _
    $region21: #{tpu_custom_call.1} parent=1 // pred_fallthru
      _
    // Predicated region
    $region22: #{tpu_custom_call.1} parent=1 // pred_check
      _
    $region23: #{tpu_custom_call.1} parent=1 // pred_check_branch
      %49 = sbr.rel (0) target = $region25
    $region24: #{tpu_custom_call.1} parent=1 // pred_region
      _
    $region25: #{tpu_custom_call.1} parent=1 // pred_fallthru
      _
    // Predicated region
    $region26: #{tpu_custom_call.1} parent=1 // pred_check
      _
    $region27: #{tpu_custom_call.1} parent=1 // pred_check_branch
      %51 = sbr.rel (0) target = $region29
    $region28: #{tpu_custom_call.1} parent=1 // pred_region
      %52 = dma.done [#allocation4], 32
    $region29: #{tpu_custom_call.1} parent=1 // pred_fallthru
      _
    // Predicated region
    $region30: #{tpu_custom_call.1} parent=1 // pred_check
      _
    $region31: #{tpu_custom_call.1} parent=1 // pred_check_branch
      %54 = sbr.rel (0) target = $region33
    $region32: #{tpu_custom_call.1} parent=1 // pred_region
      %55 = dma.done [#allocation6], 32
    $region33: #{tpu_custom_call.1} parent=1 // pred_fallthru
      _
    // Predicated region
    $region34: #{tpu_custom_call.1} parent=1 // pred_check
      _
    $region35: #{tpu_custom_call.1} parent=1 // pred_check_branch
      %57 = sbr.rel (0) target = $region37
    $region36: #{tpu_custom_call.1} parent=1 // pred_region
      %58 = dma.done [#allocation6], 32
    $region37: #{tpu_custom_call.1} parent=1 // pred_fallthru
      _
    %s59 = sld [smem:[#allocation2]]
    %v60 = vld [vmem:[%s4] sm:$0x1]
    %v61 = vld [vmem:[%s0] sm:$0x3]
    %v62 = vstv %s59
    %vm63 = vcmask 261120
    %v65 = vsel %vm63, %v60, 0
    %v68 = vsel %vm63, %v61, 0
    %70 = vmatprep.subr.mxu0 0.0
    %71 = vmatpush1.xpose.msra.mxu0 0.0
    %72 = vmatprep.subr.mxu0 0.0
    %73 = vmatpush1.xpose.msra.mxu0 0.0
    %74 = vmatprep.subr.mxu0 0.0
    %75 = vmatpush1.xpose.msra.mxu0 0.0
    %76 = vmatprep.subr.mxu0 0.0
    %77 = vmatpush1.xpose.msra.mxu0 0.0
    %78 = vmatprep.subr.mxu0 0.0
    %79 = vmatpush1.xpose.msra.mxu0 0.0
    %80 = vmatprep.subr.mxu0 0.0
    %81 = vmatpush1.xpose.msra.mxu0 0.0
    %82 = vmatprep.subr.mxu0 0.0
    %83 = vmatpush1.xpose.msra.mxu0 0.0
    %84 = vmatprep.subr.mxu0 0.0
    %85 = vmatpush1.xpose.msra.mxu0 0.0
    %86 = vmatprep.subr.mxu0 0.0
    %87 = vmatpush1.xpose.msra.mxu0 0.0
    %88 = vmatprep.subr.mxu0 0.0
    %89 = vmatpush1.xpose.msra.mxu0 0.0
    %90 = vmatprep.subr.mxu0 0.0
    %91 = vmatpush1.xpose.msra.mxu0 0.0
    %92 = vmatprep.subr.mxu0 0.0
    %93 = vmatpush1.xpose.msra.mxu0 0.0
    %94 = vmatprep.subr.mxu0 0.0
    %95 = vmatpush1.xpose.msra.mxu0 0.0
    %96 = vmatprep.subr.mxu0 0.0
    %97 = vmatpush1.xpose.msra.mxu0 0.0
    %98 = vmatprep.subr.mxu0 0.0
    %99 = vmatpush1.xpose.msra.mxu0 0.0
    %100 = vmatprep.subr.mxu0 0.0
    %101 = vmatpush1.xpose.msra.mxu0 %v68
    %102 = vmatprep.subr.mxu0 0.0
    %103 = vmatpush2.xpose.msra.mxu0 0.0
    %104 = vmatprep.subr.mxu0 0.0
    %105 = vmatpush2.xpose.msra.mxu0 0.0
    %106 = vmatprep.subr.mxu0 0.0
    %107 = vmatpush2.xpose.msra.mxu0 0.0
    %108 = vmatprep.subr.mxu0 0.0
    %109 = vmatpush2.xpose.msra.mxu0 0.0
    %110 = vmatprep.subr.mxu0 0.0
    %111 = vmatpush2.xpose.msra.mxu0 0.0
    %112 = vmatprep.subr.mxu0 0.0
    %113 = vmatpush2.xpose.msra.mxu0 0.0
    %114 = vmatprep.subr.mxu0 0.0
    %115 = vmatpush2.xpose.msra.mxu0 0.0
    %116 = vmatprep.subr.mxu0 0.0
    %117 = vmatpush2.xpose.msra.mxu0 0.0
    %118 = vmatprep.subr.mxu0 0.0
    %119 = vmatpush2.xpose.msra.mxu0 0.0
    %120 = vmatprep.subr.mxu0 0.0
    %121 = vmatpush2.xpose.msra.mxu0 0.0
    %122 = vmatprep.subr.mxu0 0.0
    %123 = vmatpush2.xpose.msra.mxu0 0.0
    %124 = vmatprep.subr.mxu0 0.0
    %125 = vmatpush2.xpose.msra.mxu0 0.0
    %126 = vmatprep.subr.mxu0 0.0
    %127 = vmatpush2.xpose.msra.mxu0 0.0
    %128 = vmatprep.subr.mxu0 0.0
    %129 = vmatpush2.xpose.msra.mxu0 0.0
    %130 = vmatprep.subr.mxu0 0.0
    %131 = vmatpush2.xpose.msra.mxu0 0.0
    %132 = vmatprep.subr.mxu0 0.0
    %133 = vmatpush2.xpose.msra.mxu0 0.0
    %134 = vmatprep.mubr.f32.mxu0 0.0
    %135 = vmatmul.mubr.f32.gmra.mxu0 %v65
    %v136 = vpop.f32.mrf.mxu0
    %v137 = vadd.f32 %v62, %v136
    %v138 = vpop.f32.mrf.mxu0
    %139 = vdwg.mxu0
    %vm140 = vcmask 8192
    %141 = vst.msk [vmem:[%s6] sm:$0x1] %vm140, %v137
    %v142 = vld [vmem:[%s4 + $0x1] sm:$0x1]
    %v143 = vld [vmem:[#allocation3] sm:$0x3]
    %v145 = vsel %vm63, %v142, 0
    %v148 = vsel %vm63, %v143, 0
    %150 = vmatprep.subr.mxu0 0.0
    %151 = vmatpush1.xpose.msra.mxu0 0.0
    %152 = vmatprep.subr.mxu0 0.0
    %153 = vmatpush1.xpose.msra.mxu0 0.0
    %154 = vmatprep.subr.mxu0 0.0
    %155 = vmatpush1.xpose.msra.mxu0 0.0
    %156 = vmatprep.subr.mxu0 0.0
    %157 = vmatpush1.xpose.msra.mxu0 0.0
    %158 = vmatprep.subr.mxu0 0.0
    %159 = vmatpush1.xpose.msra.mxu0 0.0
    %160 = vmatprep.subr.mxu0 0.0
    %161 = vmatpush1.xpose.msra.mxu0 0.0
    %162 = vmatprep.subr.mxu0 0.0
    %163 = vmatpush1.xpose.msra.mxu0 0.0
    %164 = vmatprep.subr.mxu0 0.0
    %165 = vmatpush1.xpose.msra.mxu0 0.0
    %166 = vmatprep.subr.mxu0 0.0
    %167 = vmatpush1.xpose.msra.mxu0 0.0
    %168 = vmatprep.subr.mxu0 0.0
    %169 = vmatpush1.xpose.msra.mxu0 0.0
    %170 = vmatprep.subr.mxu0 0.0
    %171 = vmatpush1.xpose.msra.mxu0 0.0
    %172 = vmatprep.subr.mxu0 0.0
    %173 = vmatpush1.xpose.msra.mxu0 0.0
    %174 = vmatprep.subr.mxu0 0.0
    %175 = vmatpush1.xpose.msra.mxu0 0.0
    %176 = vmatprep.subr.mxu0 0.0
    %177 = vmatpush1.xpose.msra.mxu0 0.0
    %178 = vmatprep.subr.mxu0 0.0
    %179 = vmatpush1.xpose.msra.mxu0 0.0
    %180 = vmatprep.subr.mxu0 0.0
    %181 = vmatpush1.xpose.msra.mxu0 %v148
    %182 = vmatprep.subr.mxu0 0.0
    %183 = vmatpush2.xpose.msra.mxu0 0.0
    %184 = vmatprep.subr.mxu0 0.0
    %185 = vmatpush2.xpose.msra.mxu0 0.0
    %186 = vmatprep.subr.mxu0 0.0
    %187 = vmatpush2.xpose.msra.mxu0 0.0
    %188 = vmatprep.subr.mxu0 0.0
    %189 = vmatpush2.xpose.msra.mxu0 0.0
    %190 = vmatprep.subr.mxu0 0.0
    %191 = vmatpush2.xpose.msra.mxu0 0.0
    %192 = vmatprep.subr.mxu0 0.0
    %193 = vmatpush2.xpose.msra.mxu0 0.0
    %194 = vmatprep.subr.mxu0 0.0
    %195 = vmatpush2.xpose.msra.mxu0 0.0
    %196 = vmatprep.subr.mxu0 0.0
    %197 = vmatpush2.xpose.msra.mxu0 0.0
    %198 = vmatprep.subr.mxu0 0.0
    %199 = vmatpush2.xpose.msra.mxu0 0.0
    %200 = vmatprep.subr.mxu0 0.0
    %201 = vmatpush2.xpose.msra.mxu0 0.0
    %202 = vmatprep.subr.mxu0 0.0
    %203 = vmatpush2.xpose.msra.mxu0 0.0
    %204 = vmatprep.subr.mxu0 0.0
    %205 = vmatpush2.xpose.msra.mxu0 0.0
    %206 = vmatprep.subr.mxu0 0.0
    %207 = vmatpush2.xpose.msra.mxu0 0.0
    %208 = vmatprep.subr.mxu0 0.0
    %209 = vmatpush2.xpose.msra.mxu0 0.0
    %210 = vmatprep.subr.mxu0 0.0
    %211 = vmatpush2.xpose.msra.mxu0 0.0
    %212 = vmatprep.subr.mxu0 0.0
    %213 = vmatpush2.xpose.msra.mxu0 0.0
    %214 = vmatprep.mubr.f32.mxu0 0.0
    %215 = vmatmul.mubr.f32.gmra.mxu0 %v145
    %v216 = vpop.f32.mrf.mxu0
    %v217 = vadd.f32 %v62, %v216
    %v218 = vpop.f32.mrf.mxu0
    %219 = vdwg.mxu0
    %220 = vst.msk [vmem:[%s6 + $0x1] sm:$0x1] %vm140, %v217
    %v221 = vld [vmem:[%s4 + $0x2] sm:$0x1]
    %v222 = vld [vmem:[#allocation5] sm:$0x3]
    %v224 = vsel %vm63, %v221, 0
    %v227 = vsel %vm63, %v222, 0
    %229 = vmatprep.subr.mxu0 0.0
    %230 = vmatpush1.xpose.msra.mxu0 0.0
    %231 = vmatprep.subr.mxu0 0.0
    %232 = vmatpush1.xpose.msra.mxu0 0.0
    %233 = vmatprep.subr.mxu0 0.0
    %234 = vmatpush1.xpose.msra.mxu0 0.0
    %235 = vmatprep.subr.mxu0 0.0
    %236 = vmatpush1.xpose.msra.mxu0 0.0
    %237 = vmatprep.subr.mxu0 0.0
    %238 = vmatpush1.xpose.msra.mxu0 0.0
    %239 = vmatprep.subr.mxu0 0.0
    %240 = vmatpush1.xpose.msra.mxu0 0.0
    %241 = vmatprep.subr.mxu0 0.0
    %242 = vmatpush1.xpose.msra.mxu0 0.0
    %243 = vmatprep.subr.mxu0 0.0
    %244 = vmatpush1.xpose.msra.mxu0 0.0
    %245 = vmatprep.subr.mxu0 0.0
    %246 = vmatpush1.xpose.msra.mxu0 0.0
    %247 = vmatprep.subr.mxu0 0.0
    %248 = vmatpush1.xpose.msra.mxu0 0.0
    %249 = vmatprep.subr.mxu0 0.0
    %250 = vmatpush1.xpose.msra.mxu0 0.0
    %251 = vmatprep.subr.mxu0 0.0
    %252 = vmatpush1.xpose.msra.mxu0 0.0
    %253 = vmatprep.subr.mxu0 0.0
    %254 = vmatpush1.xpose.msra.mxu0 0.0
    %255 = vmatprep.subr.mxu0 0.0
    %256 = vmatpush1.xpose.msra.mxu0 0.0
    %257 = vmatprep.subr.mxu0 0.0
    %258 = vmatpush1.xpose.msra.mxu0 0.0
    %259 = vmatprep.subr.mxu0 0.0
    %260 = vmatpush1.xpose.msra.mxu0 %v227
    %261 = vmatprep.subr.mxu0 0.0
    %262 = vmatpush2.xpose.msra.mxu0 0.0
    %263 = vmatprep.subr.mxu0 0.0
    %264 = vmatpush2.xpose.msra.mxu0 0.0
    %265 = vmatprep.subr.mxu0 0.0
    %266 = vmatpush2.xpose.msra.mxu0 0.0
    %267 = vmatprep.subr.mxu0 0.0
    %268 = vmatpush2.xpose.msra.mxu0 0.0
    %269 = vmatprep.subr.mxu0 0.0
    %270 = vmatpush2.xpose.msra.mxu0 0.0
    %271 = vmatprep.subr.mxu0 0.0
    %272 = vmatpush2.xpose.msra.mxu0 0.0
    %273 = vmatprep.subr.mxu0 0.0
    %274 = vmatpush2.xpose.msra.mxu0 0.0
    %275 = vmatprep.subr.mxu0 0.0
    %276 = vmatpush2.xpose.msra.mxu0 0.0
    %277 = vmatprep.subr.mxu0 0.0
    %278 = vmatpush2.xpose.msra.mxu0 0.0
    %279 = vmatprep.subr.mxu0 0.0
    %280 = vmatpush2.xpose.msra.mxu0 0.0
    %281 = vmatprep.subr.mxu0 0.0
    %282 = vmatpush2.xpose.msra.mxu0 0.0
    %283 = vmatprep.subr.mxu0 0.0
    %284 = vmatpush2.xpose.msra.mxu0 0.0
    %285 = vmatprep.subr.mxu0 0.0
    %286 = vmatpush2.xpose.msra.mxu0 0.0
    %287 = vmatprep.subr.mxu0 0.0
    %288 = vmatpush2.xpose.msra.mxu0 0.0
    %289 = vmatprep.subr.mxu0 0.0
    %290 = vmatpush2.xpose.msra.mxu0 0.0
    %291 = vmatprep.subr.mxu0 0.0
    %292 = vmatpush2.xpose.msra.mxu0 0.0
    %293 = vmatprep.mubr.f32.mxu0 0.0
    %294 = vmatmul.mubr.f32.gmra.mxu0 %v224
    %v295 = vpop.f32.mrf.mxu0
    %v296 = vadd.f32 %v62, %v295
    %v297 = vpop.f32.mrf.mxu0
    %298 = vdwg.mxu0
    %299 = vst.msk [vmem:[%s6 + $0x2] sm:$0x1] %vm140, %v296
    %v300 = vld [vmem:[%s4 + $0x3] sm:$0x1]
    %v301 = vld [vmem:[#allocation7] sm:$0x3]
    %v303 = vsel %vm63, %v300, 0
    %v306 = vsel %vm63, %v301, 0
    %308 = vmatprep.subr.mxu0 0.0
    %309 = vmatpush1.xpose.msra.mxu0 0.0
    %310 = vmatprep.subr.mxu0 0.0
    %311 = vmatpush1.xpose.msra.mxu0 0.0
    %312 = vmatprep.subr.mxu0 0.0
    %313 = vmatpush1.xpose.msra.mxu0 0.0
    %314 = vmatprep.subr.mxu0 0.0
    %315 = vmatpush1.xpose.msra.mxu0 0.0
    %316 = vmatprep.subr.mxu0 0.0
    %317 = vmatpush1.xpose.msra.mxu0 0.0
    %318 = vmatprep.subr.mxu0 0.0
    %319 = vmatpush1.xpose.msra.mxu0 0.0
    %320 = vmatprep.subr.mxu0 0.0
    %321 = vmatpush1.xpose.msra.mxu0 0.0
    %322 = vmatprep.subr.mxu0 0.0
    %323 = vmatpush1.xpose.msra.mxu0 0.0
    %324 = vmatprep.subr.mxu0 0.0
    %325 = vmatpush1.xpose.msra.mxu0 0.0
    %326 = vmatprep.subr.mxu0 0.0
    %327 = vmatpush1.xpose.msra.mxu0 0.0
    %328 = vmatprep.subr.mxu0 0.0
    %329 = vmatpush1.xpose.msra.mxu0 0.0
    %330 = vmatprep.subr.mxu0 0.0
    %331 = vmatpush1.xpose.msra.mxu0 0.0
    %332 = vmatprep.subr.mxu0 0.0
    %333 = vmatpush1.xpose.msra.mxu0 0.0
    %334 = vmatprep.subr.mxu0 0.0
    %335 = vmatpush1.xpose.msra.mxu0 0.0
    %336 = vmatprep.subr.mxu0 0.0
    %337 = vmatpush1.xpose.msra.mxu0 0.0
    %338 = vmatprep.subr.mxu0 0.0
    %339 = vmatpush1.xpose.msra.mxu0 %v306
    %340 = vmatprep.subr.mxu0 0.0
    %341 = vmatpush2.xpose.msra.mxu0 0.0
    %342 = vmatprep.subr.mxu0 0.0
    %343 = vmatpush2.xpose.msra.mxu0 0.0
    %344 = vmatprep.subr.mxu0 0.0
    %345 = vmatpush2.xpose.msra.mxu0 0.0
    %346 = vmatprep.subr.mxu0 0.0
    %347 = vmatpush2.xpose.msra.mxu0 0.0
    %348 = vmatprep.subr.mxu0 0.0
    %349 = vmatpush2.xpose.msra.mxu0 0.0
    %350 = vmatprep.subr.mxu0 0.0
    %351 = vmatpush2.xpose.msra.mxu0 0.0
    %352 = vmatprep.subr.mxu0 0.0
    %353 = vmatpush2.xpose.msra.mxu0 0.0
    %354 = vmatprep.subr.mxu0 0.0
    %355 = vmatpush2.xpose.msra.mxu0 0.0
    %356 = vmatprep.subr.mxu0 0.0
    %357 = vmatpush2.xpose.msra.mxu0 0.0
    %358 = vmatprep.subr.mxu0 0.0
    %359 = vmatpush2.xpose.msra.mxu0 0.0
    %360 = vmatprep.subr.mxu0 0.0
    %361 = vmatpush2.xpose.msra.mxu0 0.0
    %362 = vmatprep.subr.mxu0 0.0
    %363 = vmatpush2.xpose.msra.mxu0 0.0
    %364 = vmatprep.subr.mxu0 0.0
    %365 = vmatpush2.xpose.msra.mxu0 0.0
    %366 = vmatprep.subr.mxu0 0.0
    %367 = vmatpush2.xpose.msra.mxu0 0.0
    %368 = vmatprep.subr.mxu0 0.0
    %369 = vmatpush2.xpose.msra.mxu0 0.0
    %370 = vmatprep.subr.mxu0 0.0
    %371 = vmatpush2.xpose.msra.mxu0 0.0
    %372 = vmatprep.mubr.f32.mxu0 0.0
    %373 = vmatmul.mubr.f32.gmra.mxu0 %v303
    %v374 = vpop.f32.mrf.mxu0
    %v375 = vadd.f32 %v62, %v374
    %v376 = vpop.f32.mrf.mxu0
    %377 = vdwg.mxu0
    %378 = vst.msk [vmem:[%s6 + $0x3] sm:$0x1] %vm140, %v375
    // Predicated region
    $region38: #{tpu_custom_call.1} parent=1 // pred_check
      _
    $region39: #{tpu_custom_call.1} parent=1 // pred_check_branch
      %380 = sbr.rel (0) target = $region41
    $region40: #{tpu_custom_call.1} parent=1 // pred_region
      _
    $region41: #{tpu_custom_call.1} parent=1 // pred_fallthru
      _
    // Predicated region
    $region42: #{tpu_custom_call.1} parent=1 // pred_check
      _
    $region43: #{tpu_custom_call.1} parent=1 // pred_check_branch
      %382 = sbr.rel (0) target = $region45
    $region44: #{tpu_custom_call.1} parent=1 // pred_region
      _
    $region45: #{tpu_custom_call.1} parent=1 // pred_fallthru
      _
    %383 = vsyncpa [#allocation4], 1
    %384 = vsyncpa [#allocation6], 1

</llo_original>
